<compile_context>
chip_gen: v7x
topology: tpu7x:2x2x1
jax: 0.10.0
libtpu: 0.0.40
codegen_flags: <defaults>
</compile_context>

<pallas_src>
import math
import jax
import jax.numpy as jnp
from jax.experimental import pallas as pl
from jax.experimental.pallas import tpu as pltpu

EXPANSION = 4
NUM_CLASSES = 6
SUB_CLASSES = 4
SUBP = 128                      # sub-class logit width padded to one lane tile


def _round_up(x, m):
    return (x + m - 1) // m * m


# --------------------------- tiled MXU matmul (+ fused bias / residual / ReLU) ---------------------------

def _mm_single(relu, has_res):
    def kernel(*refs):
        if has_res:
            a_ref, b_ref, bias_ref, res_ref, o_ref = refs
        else:
            a_ref, b_ref, bias_ref, o_ref = refs
        r = jnp.dot(a_ref[...], b_ref[...], preferred_element_type=jnp.float32)
        r = r + bias_ref[...]
        if has_res:
            r = r + res_ref[...].astype(jnp.float32)
        if relu:
            r = jnp.maximum(r, 0.0)
        o_ref[...] = r.astype(o_ref.dtype)
    return kernel


def _mm_multi(relu, has_res):
    def kernel(*refs):
        if has_res:
            a_ref, b_ref, bias_ref, res_ref, o_ref, acc_ref = refs
        else:
            a_ref, b_ref, bias_ref, o_ref, acc_ref = refs
        k = pl.program_id(2)

        @pl.when(k == 0)
        def _():
            acc_ref[...] = jnp.zeros_like(acc_ref)

        acc_ref[...] += jnp.dot(a_ref[...], b_ref[...],
                                preferred_element_type=jnp.float32)

        @pl.when(k == pl.num_programs(2) - 1)
        def _():
            r = acc_ref[...] + bias_ref[...]
            if has_res:
                r = r + res_ref[...].astype(jnp.float32)
            if relu:
                r = jnp.maximum(r, 0.0)
            o_ref[...] = r.astype(o_ref.dtype)
    return kernel


def pallas_matmul(a, b, bias=None, residual=None, relu=False, out_dtype=jnp.float32):
    """(M,K) @ (K,N) + bias [+ residual] with optional fused ReLU.
    bf16 operands on the MXU, fp32 accumulation.  Full-dim blocks are used whenever a dim is
    small or unaligned, so no activation padding / output slicing is ever performed."""
    M, K = a.shape
    K2, N = b.shape
    assert K == K2
    a = a.astype(jnp.bfloat16)
    b = b.astype(jnp.bfloat16)
    if bias is None:
        bias_row = jnp.zeros((1, N), jnp.float32)
    else:
        bias_row = bias.reshape(1, N).astype(jnp.float32)

    # ---- tile selection ----
    if M <= 256 or M % 128 != 0:
        tm = M                                  # full-M block (legal for any M)
    elif M % 256 == 0:
        tm = 256
    else:
        tm = 128
    if M <= 64 and N % 512 == 0:
        tn = 512                                # small-M: wide lane-dense N tiles, few steps
    elif N % 256 == 0:
        tn = 256
    elif N % 128 == 0:
        tn = 128
    else:
        tn = N                                  # full-N block (legal)
    # K: single full-K pass unless the RHS block would be large.
    if K % 256 == 0 and K * tn * 2 > (8 << 20):
        tk = 512 if K % 512 == 0 else 256
    else:
        tk = K

    has_res = residual is not None
    ops = [a, b, bias_row]
    if has_res:
        ops.append(residual.astype(jnp.bfloat16))

    if tk == K:
        in_specs = [pl.BlockSpec((tm, K), lambda i, j: (i, 0)),
                    pl.BlockSpec((K, tn), lambda i, j: (0, j)),
                    pl.BlockSpec((1, tn), lambda i, j: (0, j))]
        if has_res:
            in_specs.append(pl.BlockSpec((tm, tn), lambda i, j: (i, j)))
        return pl.pallas_call(
            _mm_single(relu, has_res),
            out_shape=jax.ShapeDtypeStruct((M, N), out_dtype),
            grid_spec=pltpu.PrefetchScalarGridSpec(
                num_scalar_prefetch=0,
                grid=(M // tm, N // tn),
                in_specs=in_specs,
                out_specs=pl.BlockSpec((tm, tn), lambda i, j: (i, j))),
            compiler_params=pltpu.CompilerParams(
                dimension_semantics=("parallel", "parallel")),
        )(*ops)

    in_specs = [pl.BlockSpec((tm, tk), lambda i, j, k: (i, k)),
                pl.BlockSpec((tk, tn), lambda i, j, k: (k, j)),
                pl.BlockSpec((1, tn), lambda i, j, k: (0, j))]
    if has_res:
        in_specs.append(pl.BlockSpec((tm, tn), lambda i, j, k: (i, j)))
    return pl.pallas_call(
        _mm_multi(relu, has_res),
        out_shape=jax.ShapeDtypeStruct((M, N), out_dtype),
        grid_spec=pltpu.PrefetchScalarGridSpec(
            num_scalar_prefetch=0,
            grid=(M // tm, N // tn, K // tk),
            in_specs=in_specs,
            out_specs=pl.BlockSpec((tm, tn), lambda i, j, k: (i, j)),
            scratch_shapes=[pltpu.VMEM((tm, tn), jnp.float32)]),
        compiler_params=pltpu.CompilerParams(
            dimension_semantics=("parallel", "parallel", "arbitrary")),
    )(*ops)


# --------------------------- fused 3x3 (stride 1) conv ---------------------------

def conv3x3_fused(x, w3, bias, relu):
    """3x3 / stride-1 / pad-1 conv + folded-BN bias + optional ReLU.

    The zero-haloed, width-unrolled (H+2, W, 3C) operand is built once per sample in a VMEM
    scratch (3 aligned sub-ref stores) and the conv is 3 row-shifted K=3C matmuls.  No XLA
    pad / im2col / trim ever touches HBM, and the output is exactly (N, H, W, Cout)."""
    N, H, W, C = x.shape
    Cout = w3.shape[-1]
    P = H * W
    tn = 256 if Cout % 256 == 0 else (128 if Cout % 128 == 0 else Cout)
    bias_row = bias.reshape(1, Cout).astype(jnp.float32)

    def kernel(x_ref, w_ref, b_ref, o_ref, xw_ref):
        # (Re)build the width-unrolled buffer only on the first Cout-tile of each sample.
        @pl.when(pl.program_id(1) == 0)
        def _():
            xw_ref[...] = jnp.zeros_like(xw_ref)
            xb = x_ref[0].reshape(H, W, C)
            xw_ref[1:H + 1, :, C:2 * C] = xb                       # column tap dj = 1
            xw_ref[1:H + 1, 1:W, 0:C] = xb[:, :W - 1, :]           # column tap dj = 0
            xw_ref[1:H + 1, 0:W - 1, 2 * C:3 * C] = xb[:, 1:, :]   # column tap dj = 2

        acc = jnp.dot(xw_ref[0:H].reshape(P, 3 * C), w_ref[0],
                      preferred_element_type=jnp.float32)
        acc = acc + jnp.dot(xw_ref[1:H + 1].reshape(P, 3 * C), w_ref[1],
                            preferred_element_type=jnp.float32)
        acc = acc + jnp.dot(xw_ref[2:H + 2].reshape(P, 3 * C), w_ref[2],
                            preferred_element_type=jnp.float32)
        acc = acc + b_ref[...]
        if relu:
            acc = jnp.maximum(acc, 0.0)
        o_ref[0] = acc.astype(o_ref.dtype)

    y = pl.pallas_call(
        kernel,
        out_shape=jax.ShapeDtypeStruct((N, P, Cout), jnp.bfloat16),
        grid_spec=pltpu.PrefetchScalarGridSpec(
            num_scalar_prefetch=0,
            grid=(N, Cout // tn),
            in_specs=[pl.BlockSpec((1, P, C), lambda n, j: (n, 0, 0)),
                      pl.BlockSpec((3, 3 * C, tn), lambda n, j: (0, 0, j)),
                      pl.BlockSpec((1, tn), lambda n, j: (0, j))],
            out_specs=pl.BlockSpec((1, P, tn), lambda n, j: (n, 0, j)),
            scratch_shapes=[pltpu.VMEM((H + 2, W, 3 * C), jnp.bfloat16)]),
        compiler_params=pltpu.CompilerParams(
            dimension_semantics=("parallel", "arbitrary")),
    )(x.reshape(N, P, C), w3, bias_row)
    return y.reshape(N, H, W, Cout)


# --------------------------- maxpool 3x3 / stride 2 / pad 1 ---------------------------
# TODO(synk): the 4 parity phases are still built with XLA strided slices; moving the phase
#             extraction into the kernel would save a few HBM passes over the stem output.

def maxpool_3x3_s2(x):
    N, H, W, C = x.shape
    Ho = (H - 1) // 2 + 1
    Wo = (W - 1) // 2 + 1
    xp = jnp.pad(x, ((0, 0), (1, 1), (1, 1), (0, 0)), constant_values=-jnp.inf)

    phases = []
    for a in range(2):
        for b in range(2):
            ph = xp[:, a::2, b::2, :][:, :Ho + 1, :Wo + 1, :]
            pad_h = Ho + 1 - ph.shape[1]
            pad_w = Wo + 1 - ph.shape[2]
            if pad_h or pad_w:
                ph = jnp.pad(ph, ((0, 0), (0, pad_h), (0, pad_w), (0, 0)),
                             constant_values=-jnp.inf)
            phases.append(ph)

    def kernel(p00_ref, p01_ref, p10_ref, p11_ref, o_ref):
        refs = ((p00_ref, p01_ref), (p10_ref, p11_ref))
        acc = None
        for di in range(3):
            for dj in range(3):
                r = refs[di & 1][dj & 1]
                v = r[0, di // 2:di // 2 + Ho, dj // 2:dj // 2 + Wo, :]
                acc = v if acc is None else jnp.maximum(acc, v)
        o_ref[0] = acc

    in_spec = pl.BlockSpec((1, Ho + 1, Wo + 1, C), lambda n: (n, 0, 0, 0))
    return pl.pallas_call(
        kernel,
        out_shape=jax.ShapeDtypeStruct((N, Ho, Wo, C), x.dtype),
        grid_spec=pltpu.PrefetchScalarGridSpec(
            num_scalar_prefetch=0,
            grid=(N,),
            in_specs=[in_spec, in_spec, in_spec, in_spec],
            out_specs=pl.BlockSpec((1, Ho, Wo, C), lambda n: (n, 0, 0, 0))),
        compiler_params=pltpu.CompilerParams(dimension_semantics=("parallel",)),
    )(*phases)


# --------------------------- conv dispatch ---------------------------

def _im2col(x, kh, kw, stride, pad):
    """x: (N,H,W,C) bf16 -> patches (N*Ho*Wo, Kp) ordered (tap, c); K is zero-padded to a
    multiple of 128 inside the (already materializing) concatenate, matching the weight pad."""
    N, H, W, C = x.shape
    xp = jnp.pad(x, ((0, 0), (pad, pad), (pad, pad), (0, 0)))
    Hp, Wp = H + 2 * pad, W + 2 * pad
    Ho = (Hp - kh) // stride + 1
    Wo = (Wp - kw) // stride + 1
    cols = []
    for i in range(kh):
        for j in range(kw):
            cols.append(xp[:, i:i + Ho * stride:stride, j:j + Wo * stride:stride, :])
    Kraw = kh * kw * C
    Kp = _round_up(Kraw, 128)
    if Kp != Kraw:
        cols.append(jnp.zeros((N, Ho, Wo, Kp - Kraw), x.dtype))
    patches = jnp.concatenate(cols, axis=-1)
    return patches.reshape(N * Ho * Wo, Kp), (N, Ho, Wo)


def apply_conv(x, cv, residual=None):
    """Conv + folded-BN + optional ReLU.  `residual` (1x1 convs only) fuses the Bottleneck
    residual add + ReLU into the matmul epilogue."""
    k, s, relu = cv['k'], cv['stride'], cv['relu']
    w, b = cv['w'], cv['b']
    if k == 1:
        if s != 1:
            x = x[:, ::s, ::s, :]
        N, H, W, C = x.shape
        cout = w.shape[-1]
        res2 = None
        if residual is not None:
            res2 = residual.reshape(N * H * W, cout)
            relu = True                       # Bottleneck applies ReLU after the residual add
        y = pallas_matmul(x.reshape(N * H * W, C), w, b,
                          residual=res2, relu=relu, out_dtype=jnp.bfloat16)
        return y.reshape(N, H, W, cout)
    if k == 3 and s == 1:
        return conv3x3_fused(x, w, b, relu)
    # fallback: im2col (7x7 stem and the three 3x3 stride-2 convs only)
    patches, (N, Ho, Wo) = _im2col(x, k, k, s, cv['pad'])
    cout = w.shape[-1]
    y = pallas_matmul(patches, w, b, relu=relu, out_dtype=jnp.bfloat16)
    return y.reshape(N, Ho, Wo, cout)


def bottleneck_forward(x, bp):
    identity = apply_conv(x, bp['down']) if 'down' in bp else x
    out = apply_conv(x, bp['c1'])
    out = apply_conv(out, bp['c2'])
    # c3 1x1 conv with the residual add + ReLU fused into its epilogue.
    return apply_conv(out, bp['c3'], residual=identity)


# --------------------------- fused avgpool + 6-head classifier ---------------------------

def multihead_classifier(x, head):
    """x: (N, H, W, 2048) bf16 -> (NUM_CLASSES, N, SUBP) fp32 logits (padded sub-class dim).
    One kernel: grid over heads; avg-pool, 2048x512 matmul+ReLU and 512x4 matmul all stay in
    VMEM (the hidden activation never hits HBM)."""
    N, H, W, F = x.shape
    HW = H * W

    def kernel(x_ref, w1_ref, b1_ref, w2_ref, b2_ref, o_ref):
        feat = jnp.mean(x_ref[...].astype(jnp.float32), axis=1)          # (N, F)
        h = jnp.dot(feat.astype(jnp.bfloat16), w1_ref[...],
                    preferred_element_type=jnp.float32)
        h = jnp.maximum(h + b1_ref[0], 0.0)
        # TODO(synk): nn.Dropout() implemented as identity (eval-mode semantics).
        logits = jnp.dot(h.astype(jnp.bfloat16), w2_ref[0],
                         preferred_element_type=jnp.float32)
        o_ref[0] = logits + b2_ref[0]

    return pl.pallas_call(
        kernel,
        out_shape=jax.ShapeDtypeStruct((NUM_CLASSES, N, SUBP), jnp.float32),
        grid_spec=pltpu.PrefetchScalarGridSpec(
            num_scalar_prefetch=0,
            grid=(NUM_CLASSES,),
            in_specs=[pl.BlockSpec((N, HW, F), lambda j: (0, 0, 0)),
                      pl.BlockSpec((F, 512), lambda j: (0, j)),
                      pl.BlockSpec((1, 1, 512), lambda j: (j, 0, 0)),
                      pl.BlockSpec((1, 512, SUBP), lambda j: (j, 0, 0)),
                      pl.BlockSpec((1, 1, SUBP), lambda j: (j, 0, 0))],
            out_specs=pl.BlockSpec((1, N, SUBP), lambda j: (j, 0, 0))),
        compiler_params=pltpu.CompilerParams(dimension_semantics=("parallel",)),
    )(x.reshape(N, HW, F), head['w1'], head['b1'], head['w2'], head['b2'])


# --------------------------- parameters (BN folded + laid out at build time) ---------------------------

class KeyGen:
    def __init__(self, key):
        self.key = key

    def __call__(self):
        self.key, sub = jax.random.split(self.key)
        return sub


def _conv_w(kg, cout, cin, k):
    fan_in = cin * k * k
    return jax.random.normal(kg(), (cout, cin, k, k), jnp.float32) * math.sqrt(2.0 / fan_in)


def _bn(c):
    # (gamma, beta, running_mean, running_var) — eval-mode BatchNorm
    return (jnp.ones((c,), jnp.float32), jnp.zeros((c,), jnp.float32),
            jnp.zeros((c,), jnp.float32), jnp.ones((c,), jnp.float32))


def _linear(kg, out_f, in_f):
    w = jax.random.normal(kg(), (out_f, in_f), jnp.float32) * math.sqrt(1.0 / in_f)
    b = jnp.zeros((out_f,), jnp.float32)
    return w, b


def _fold_conv(kg, cout, cin, k, stride, pad, relu):
    w = _conv_w(kg, cout, cin, k)
    gamma, beta, mean, var = _bn(cout)
    scale = gamma / jnp.sqrt(var + 1e-5)
    shift = beta - mean * scale
    wm = jnp.transpose(w, (2, 3, 1, 0)).reshape(k * k, cin, cout) * scale[None, None, :]
    if k == 1:
        wl = wm[0]                                        # (cin, cout)
    elif k == 3 and stride == 1:
        wl = wm.reshape(3, 3 * cin, cout)                 # fused 3-tap layout
    else:
        Kraw = k * k * cin
        Kp = _round_up(Kraw, 128)
        wl = wm.reshape(Kraw, cout)
        if Kp != Kraw:                                    # e.g. stem: 147 -> 256
            wl = jnp.zeros((Kp, cout), jnp.float32).at[:Kraw].set(wl)
    return {'w': wl.astype(jnp.bfloat16), 'b': shift.astype(jnp.float32),
            'k': k, 'stride': stride, 'pad': pad, 'relu': relu}


def make_params(key, num_classes=NUM_CLASSES, sub_classes=SUB_CLASSES):
    kg = KeyGen(key)
    params = {'stem': _fold_conv(kg, 64, 3, 7, 2, 3, True)}
    inplanes = 64
    layers = []
    for planes, blocks, stride in [(64, 2, 1), (128, 2, 2), (256, 2, 2), (512, 2, 2)]:
        blk_list = []
        for bi in range(blocks):
            s = stride if bi == 0 else 1
            bp = {'c1': _fold_conv(kg, planes, inplanes, 1, 1, 0, True),
                  'c2': _fold_conv(kg, planes, planes, 3, s, 1, True),
                  'c3': _fold_conv(kg, planes * EXPANSION, planes, 1, 1, 0, False)}
            if bi == 0 and (s != 1 or inplanes != planes * EXPANSION):
                bp['down'] = _fold_conv(kg, planes * EXPANSION, inplanes, 1, s, 0, False)
            blk_list.append(bp)
            inplanes = planes * EXPANSION
        layers.append(blk_list)
    params['layers'] = layers

    # fused multi-head classifier: W1 (2048, 6*512); per-head W2 padded to 128 lanes.
    feat_dim = 512 * EXPANSION
    w1_list, b1_list, w2_list, b2_list = [], [], [], []
    for _ in range(num_classes):
        w1, b1 = _linear(kg, 512, feat_dim)
        w2, b2 = _linear(kg, sub_classes, 512)
        w1_list.append(w1)
        b1_list.append(b1)
        w2_list.append(w2)
        b2_list.append(b2)
    W1 = jnp.concatenate([w.T for w in w1_list], axis=1)                    # (2048, 6*512)
    B1 = jnp.stack(b1_list).reshape(num_classes, 1, 512)                    # (6, 1, 512)
    W2 = jnp.zeros((num_classes, 512, SUBP), jnp.float32)
    W2 = W2.at[:, :, :sub_classes].set(jnp.stack([w.T for w in w2_list]))   # (6, 512, 128)
    B2 = jnp.zeros((num_classes, 1, SUBP), jnp.float32)
    B2 = B2.at[:, 0, :sub_classes].set(jnp.stack(b2_list))                  # (6, 1, 128)
    params['head'] = {'w1': W1.astype(jnp.bfloat16), 'b1': B1.astype(jnp.float32),
                      'w2': W2.astype(jnp.bfloat16), 'b2': B2.astype(jnp.float32)}
    return params


# --------------------------- forward ---------------------------

def resnet18_multihead_forward(params, x_nchw,
                               num_classes=NUM_CLASSES, sub_classes=SUB_CLASSES):
    # NCHW (PyTorch) -> NHWC (lane-dense kernel layout), bf16 activations.
    x = jnp.transpose(x_nchw, (0, 2, 3, 1)).astype(jnp.bfloat16)
    x = apply_conv(x, params['stem'])
    x = maxpool_3x3_s2(x)

    for blks in params['layers']:
        for bp in blks:
            x = bottleneck_forward(x, bp)
    # s1..s3 intermediate features are unused by the torch forward; only the final feature is.

    head_out = multihead_classifier(x, params['head'])[:, :, :sub_classes]  # (6, B, 4)
    out = jnp.transpose(head_out, (1, 0, 2))            # (B, 6, 4) == cat of per-head outputs
    return out.reshape(-1, sub_classes, num_classes)    # matches torch .view (raw reinterpret)


if __name__ == "__main__":
    key = jax.random.PRNGKey(0)
    pkey, xkey = jax.random.split(key)
    params = make_params(pkey)
    x = jax.random.normal(xkey, (2, 3, 64, 64), jnp.float32)   # small NCHW input
    out = resnet18_multihead_forward(params, x)
    out = jax.block_until_ready(out)
    assert out.shape == (2, SUB_CLASSES, NUM_CLASSES), out.shape
    assert bool(jnp.all(jnp.isfinite(out)))
    print("KERNEL_OK")
</pallas_src>

<mosaic_0001>
module attributes {stable_mosaic.version = 11 : i64} {
  func.func @kernel(%arg0: i32, %arg1: i32, %arg2: memref<256x256xbf16, #tpu.memory_space<vmem>>, %arg3: memref<256x64xbf16, #tpu.memory_space<vmem>>, %arg4: memref<1x64xf32, #tpu.memory_space<vmem>>, %arg5: memref<256x64xbf16, #tpu.memory_space<vmem>>) attributes {dimension_semantics = [#tpu.dimension_semantics<parallel>, #tpu.dimension_semantics<parallel>], iteration_bounds = array<i64: 8, 1>, scalar_prefetch = 0 : i64, scratch_operands = 0 : i64, tpu.core_type = #tpu.core_type<tc>, window_params = [{transform_indices = @transform_0, window_bounds = array<i64: 256, 256>}, {transform_indices = @transform_1, window_bounds = array<i64: 256, 64>}, {transform_indices = @transform_2, window_bounds = array<i64: 1, 64>}, {transform_indices = @transform_3, window_bounds = array<i64: 256, 64>}]} {
    %c0 = arith.constant 0 : index
    %c0_0 = arith.constant 0 : index
    %0 = vector.load %arg2[%c0, %c0_0] : memref<256x256xbf16, #tpu.memory_space<vmem>>, vector<256x256xbf16>
    %c0_1 = arith.constant 0 : index
    %c0_2 = arith.constant 0 : index
    %1 = vector.load %arg3[%c0_1, %c0_2] : memref<256x64xbf16, #tpu.memory_space<vmem>>, vector<256x64xbf16>
    %cst = arith.constant dense<0.000000e+00> : vector<256x64xf32>
    %2 = tpu.matmul %0, %1, %cst {dimension_numbers = #tpu.dot_dimension_numbers<[1], [0], [0], [1], [0, 0, 1, 1], [], []>} : vector<256x256xbf16>, vector<256x64xbf16>, vector<256x64xf32> -> vector<256x64xf32>
    %c0_3 = arith.constant 0 : index
    %c0_4 = arith.constant 0 : index
    %3 = vector.load %arg4[%c0_3, %c0_4] : memref<1x64xf32, #tpu.memory_space<vmem>>, vector<1x64xf32>
    %4 = vector.broadcast %3 : vector<1x64xf32> to vector<256x64xf32>
    %5 = arith.addf %2, %4 : vector<256x64xf32>
    %cst_5 = arith.constant 0.000000e+00 : f32
    %6 = vector.broadcast %cst_5 : f32 to vector<256x64xf32>
    %7 = arith.maximumf %5, %6 : vector<256x64xf32>
    %8 = arith.truncf %7 : vector<256x64xf32> to vector<256x64xbf16>
    %c0_6 = arith.constant 0 : index
    %c0_7 = arith.constant 0 : index
    %9 = vector.load %arg5[%c0_6, %c0_7] : memref<256x64xbf16, #tpu.memory_space<vmem>>, vector<256x64xbf16>
    tpu.vector_store %arg5[%c0_6, %c0_7], %8 {strides = array<i32>} : memref<256x64xbf16, #tpu.memory_space<vmem>>, vector<256x64xbf16>,
    return
  }
  func.func @transform_0(%arg0: i32, %arg1: i32) -> (i32, i32) {
    %c0_i32 = arith.constant 0 : i32
    %c0_i32_0 = arith.constant 0 : i32
    return %arg0, %c0_i32 : i32, i32
  }
  func.func @transform_1(%arg0: i32, %arg1: i32) -> (i32, i32) {
    %c0_i32 = arith.constant 0 : i32
    %c0_i32_0 = arith.constant 0 : i32
    return %c0_i32, %arg1 : i32, i32
  }
  func.func @transform_2(%arg0: i32, %arg1: i32) -> (i32, i32) {
    %c0_i32 = arith.constant 0 : i32
    %c0_i32_0 = arith.constant 0 : i32
    return %c0_i32, %arg1 : i32, i32
  }
  func.func @transform_3(%arg0: i32, %arg1: i32) -> (i32, i32) {
    %c0_i32 = arith.constant 0 : i32
    return %arg0, %arg1 : i32, i32
  }
}

</mosaic_0001>

<llo_original>
// kernel: tpu_custom_call.1
$region0: #{tpu_custom_call.1}
  #allocation0 [shape = 'u32[]', space=smem, size = 0x4, offset = 0x4, fixed_abs, tag = 'smem constant byte address 0x4 - core index']
  #allocation1 [shape = 'u32[144,128]{1,0:T(1,128)}', space=vmem, size = 0x12000, scoped, tag = 'internal scratch']
  %s0 = inlined_call_operand.hbm [shape: bf16[2048,256], index: 0, kind: input, shape index: {}]
  %s1 = inlined_call_operand.vmem [shape: bf16[256,64], index: 1, kind: input, shape index: {}]
  %s2 = inlined_call_operand.vmem [shape: f32[1,64], index: 2, kind: input, shape index: {}]
  %s3 = inlined_call_operand.vmem [shape: bf16[2048,64], index: 3, kind: output, shape index: {}]
  %s4 = sld [smem:[#allocation0]]
  $region49: #{tpu_custom_call.1} parent=0
    _
  %s6 = ssub.s32 1, %s4
  %s7 = scalar_select 0, %s6, %s4
  $region1: #{tpu_custom_call.1} parent=0
    #allocation2 [shape = 'u8[262144]{0}', space=vmem, size = 0x40000, scoped, tag = 'input window, operand 0']
    #allocation3 [shape = 's32[2]{0}', space=sflag, size = 0x8, scoped, tag = 'scoped memory for tpu_custom_call.1']
    %8 = vsyncpa [#allocation3], 0
    %s9 = scalar_lea.sflag [#allocation3], 1
    %10 = vsyncpa %s9, 0
    loop: start=0, step=1, limit=10
    $region2: #{tpu_custom_call.1} parent=1 // loop_pre_header
      _
    $region3: #{tpu_custom_call.1} parent=1 // loop_header
      %s12 = sphi 0, %s16
      %p13 = scmp.ge.s32.totalorder %s12, 10
      %s19 = sphi 0, %s31
      %s20 = sphi 0, %s27
      %s21 = sphi 0, %s19
      %s22 = sphi 0, %s20
      %s23 = sphi 0, %s21
      %s24 = sphi 0, %s22
      %s34 = sphi 0, %s36
      %s37 = sphi 0, %s34
      %s38 = sphi 0, %s37
      %s54 = sphi 0, %s38
      %s60 = sphi 0, %s62
      %s63 = sphi 0, %s60
      %s64 = sphi 0, %s63
      %s80 = sphi 0, %s64
      %s86 = sphi 0, %s88
      %s89 = sphi 0, %s86
      %s90 = sphi 0, %s89
      %s106 = sphi 0, %s90
      %s114 = sphi 0, %s116
      %s117 = sphi 0, %s114
      %s118 = sphi 0, %s117
      %s134 = sphi 0, %s118
    $region4: #{tpu_custom_call.1} parent=1 // loop_header_branch
      %15 = sbr.rel (%p13) target = $region8
    $region5: #{tpu_custom_call.1} parent=1 // loop_body
      %s17 = ssub.s32 %s12, 1
      %s18 = ssub.s32 %s12, 2
      %s25 = sadd.s32 1, %s20
      %p26 = scmp.ge.s32.totalorder %s25, 1
      %s27 = scalar_select %p26, 0, %s25
      %s28 = sadd.s32 1, %s19
      %s29 = scalar_select %p26, %s28, %s19
      %p30 = scmp.ge.s32.totalorder %s29, 8
      %s31 = scalar_select %p30, 0, %s29
      %s32 = ssub.s32 %s19, %s31
      %p33 = scmp.eq.s32.totalorder %s32, 0
      %s35 = sadd.s32 %s34, 1
      %s36 = scalar_select %p33, %s34, %s35
      %p39 = pneg %p33
      %p40 = scmp.eq.s32.totalorder %s12, 7
      %p41 = por %p39, %p40
      %p42 = scmp.ne.s32.totalorder %s34, %s37
      %p43 = scmp.eq.s32.totalorder %s12, 0
      %p44 = por %p42, %p43
      %p45 = scmp.ne.s32.totalorder %s34, %s37
      %p46 = scmp.eq.s32.totalorder %s17, 7
      %p47 = por %p45, %p46
      %p48 = scmp.ne.s32.totalorder %s37, %s38
      %p49 = scmp.eq.s32.totalorder %s17, 0
      %p50 = por %p48, %p49
      %p51 = scmp.ne.s32.totalorder %s37, %s38
      %p52 = scmp.eq.s32.totalorder %s18, 7
      %p53 = por %p51, %p52
      %p55 = scmp.ne.s32.totalorder %s38, %s54
      %p56 = scmp.eq.s32.totalorder %s18, 0
      %p57 = por %p55, %p56
      %s58 = ssub.s32 %s20, %s27
      %p59 = scmp.eq.s32.totalorder %s58, 0
      %s61 = sadd.s32 %s60, 1
      %s62 = scalar_select %p59, %s60, %s61
      %p65 = pneg %p59
      %p66 = scmp.eq.s32.totalorder %s12, 7
      %p67 = por %p65, %p66
      %p68 = scmp.ne.s32.totalorder %s60, %s63
      %p69 = scmp.eq.s32.totalorder %s12, 0
      %p70 = por %p68, %p69
      %p71 = scmp.ne.s32.totalorder %s60, %s63
      %p72 = scmp.eq.s32.totalorder %s17, 7
      %p73 = por %p71, %p72
      %p74 = scmp.ne.s32.totalorder %s63, %s64
      %p75 = scmp.eq.s32.totalorder %s17, 0
      %p76 = por %p74, %p75
      %p77 = scmp.ne.s32.totalorder %s63, %s64
      %p78 = scmp.eq.s32.totalorder %s18, 7
      %p79 = por %p77, %p78
      %p81 = scmp.ne.s32.totalorder %s64, %s80
      %p82 = scmp.eq.s32.totalorder %s18, 0
      %p83 = por %p81, %p82
      %s84 = ssub.s32 %s20, %s27
      %p85 = scmp.eq.s32.totalorder %s84, 0
      %s87 = sadd.s32 %s86, 1
      %s88 = scalar_select %p85, %s86, %s87
      %p91 = pneg %p85
      %p92 = scmp.eq.s32.totalorder %s12, 7
      %p93 = por %p91, %p92
      %p94 = scmp.ne.s32.totalorder %s86, %s89
      %p95 = scmp.eq.s32.totalorder %s12, 0
      %p96 = por %p94, %p95
      %p97 = scmp.ne.s32.totalorder %s86, %s89
      %p98 = scmp.eq.s32.totalorder %s17, 7
      %p99 = por %p97, %p98
      %p100 = scmp.ne.s32.totalorder %s89, %s90
      %p101 = scmp.eq.s32.totalorder %s17, 0
      %p102 = por %p100, %p101
      %p103 = scmp.ne.s32.totalorder %s89, %s90
      %p104 = scmp.eq.s32.totalorder %s18, 7
      %p105 = por %p103, %p104
      %p107 = scmp.ne.s32.totalorder %s90, %s106
      %p108 = scmp.eq.s32.totalorder %s18, 0
      %p109 = por %p107, %p108
      %s110 = ssub.s32 %s19, %s31
      %s111 = ssub.s32 %s20, %s27
      %s112 = sor.u32 %s110, %s111
      %p113 = scmp.eq.s32.totalorder %s112, 0
      %s115 = sadd.s32 %s114, 1
      %s116 = scalar_select %p113, %s114, %s115
      %p119 = pneg %p113
      %p120 = scmp.eq.s32.totalorder %s12, 7
      %p121 = por %p119, %p120
      %p122 = scmp.ne.s32.totalorder %s114, %s117
      %p123 = scmp.eq.s32.totalorder %s12, 0
      %p124 = por %p122, %p123
      %p125 = scmp.ne.s32.totalorder %s114, %s117
      %p126 = scmp.eq.s32.totalorder %s17, 7
      %p127 = por %p125, %p126
      %p128 = scmp.ne.s32.totalorder %s117, %s118
      %p129 = scmp.eq.s32.totalorder %s17, 0
      %p130 = por %p128, %p129
      %p131 = scmp.ne.s32.totalorder %s117, %s118
      %p132 = scmp.eq.s32.totalorder %s18, 7
      %p133 = por %p131, %p132
      %p135 = scmp.ne.s32.totalorder %s118, %s134
      %p136 = scmp.eq.s32.totalorder %s18, 0
      %p137 = por %p135, %p136
      %p138 = scmp.le.s32.totalorder 1, %s12
      %p139 = scmp.lt.s32.totalorder %s12, 9
      %p140 = pnand %p138, %p139
      %p141 = pneg %p140
      // Predicated region
      $region9: #{tpu_custom_call.1} parent=5 // pred_check
        _
      $region10: #{tpu_custom_call.1} parent=5 // pred_check_branch
        %143 = sbr.rel (%p140) target = $region12
      $region11: #{tpu_custom_call.1} parent=5 // pred_region
        %s144 = ssub.s32 %s12, 1
        // Predicated region
        $region13: #{tpu_custom_call.1} parent=11 // pred_check
          %p145 = pneg %p76
        $region14: #{tpu_custom_call.1} parent=11 // pred_check_branch
          %147 = sbr.rel (%p145) target = $region16
        $region15: #{tpu_custom_call.1} parent=11 // pred_region
          %p148 = scmp.lt.s32.totalorder %s22, 0
          %s149 = scalar_select %p148, %s22, 0
          %s150 = smul.addr %s149, 4
          %s151 = scalar_lea.vmem %s1, %s150
        $region16: #{tpu_custom_call.1} parent=11 // pred_fallthru
          _
        // Predicated region
        $region17: #{tpu_custom_call.1} parent=11 // pred_check
          %p152 = pneg %p102
        $region18: #{tpu_custom_call.1} parent=11 // pred_check_branch
          %154 = sbr.rel (%p152) target = $region20
        $region19: #{tpu_custom_call.1} parent=11 // pred_region
          %p155 = scmp.lt.s32.totalorder %s22, 0
          %s156 = scalar_select %p155, %s22, 0
          %s157 = scalar_lea.vmem %s2, %s156
        $region20: #{tpu_custom_call.1} parent=11 // pred_fallthru
          _
      $region12: #{tpu_custom_call.1} parent=5 // pred_fallthru
        _
      %p158 = scmp.lt.s32.totalorder %s12, 8
      // Predicated region
      $region21: #{tpu_custom_call.1} parent=5 // pred_check
        %p159 = pneg %p158
      $region22: #{tpu_custom_call.1} parent=5 // pred_check_branch
        %161 = sbr.rel (%p159) target = $region24
      $region23: #{tpu_custom_call.1} parent=5 // pred_region
        // Predicated region
        $region25: #{tpu_custom_call.1} parent=23 // pred_check
          %p162 = pneg %p44
        $region26: #{tpu_custom_call.1} parent=23 // pred_check_branch
          %164 = sbr.rel (%p162) target = $region28
        $region27: #{tpu_custom_call.1} parent=23 // pred_region
          %s165 = sand.u32 %s34, 1
          %s166 = scalar_lea.sflag [#allocation3], %s165
          %s167 = sand.u32 %s34, 1
          %s168 = smul.addr %s167, 256
          %s169 = scalar_lea.vmem [#allocation2], %s168
          %s170 = smul.u32 32, %s19
          %s172 = ssub.s32 4096, 4096
          %173 = vsyncadd %s166, %s172
          %s174 = smul.addr %s170, 2
          %s175 = smul.addr %s174, 64
          %s176 = scalar_lea.hbm %s0, %s175
          %s177 = sshll.u32 %s169, 4
          %s178 = int_to_ptr.vmem [resolvable:$true] %s177
          %183 = dma.hbm_to_vmem [thread:$0]  %s176, 4096, %s178, %s166, 128, 128, 8
        $region28: #{tpu_custom_call.1} parent=23 // pred_fallthru
          _
      $region24: #{tpu_custom_call.1} parent=5 // pred_fallthru
        _
      %p184 = scmp.le.s32.totalorder 1, %s12
      %p185 = scmp.lt.s32.totalorder %s12, 9
      %p186 = pnand %p184, %p185
      %p187 = pneg %p186
      // Predicated region
      $region29: #{tpu_custom_call.1} parent=5 // pred_check
        _
      $region30: #{tpu_custom_call.1} parent=5 // pred_check_branch
        %189 = sbr.rel (%p186) target = $region32
      $region31: #{tpu_custom_call.1} parent=5 // pred_region
        %s190 = ssub.s32 %s12, 1
        %s191 = sand.u32 %s37, 1
        %s192 = scalar_lea.sflag [#allocation3], %s191
        %s193 = sand.u32 %s37, 1
        %s194 = smul.addr %s193, 256
        %s195 = scalar_lea.vmem [#allocation2], %s194
        // Predicated region
        $region33: #{tpu_custom_call.1} parent=31 // pred_check
          %p196 = pneg %p50
        $region34: #{tpu_custom_call.1} parent=31 // pred_check_branch
          %198 = sbr.rel (%p196) target = $region36
        $region35: #{tpu_custom_call.1} parent=31 // pred_region
          %199 = dma.done %s192, 4096
        $region36: #{tpu_custom_call.1} parent=31 // pred_fallthru
          _
        %s200 = sand.u32 %s37, 1
        %s201 = scalar_lea.sflag [#allocation3], %s200
        %s202 = sand.u32 %s37, 1
        %s203 = smul.addr %s202, 256
        %s204 = scalar_lea.vmem [#allocation2], %s203
        %p205 = pneg %p50
        %p206 = pneg %p47
        %p207 = scmp.lt.s32.totalorder %s22, 0
        %s208 = scalar_select %p207, %s22, 0
        %s209 = smul.addr %s208, 4
        %s210 = scalar_lea.vmem %s1, %s209
        %p211 = pneg %p76
        %p212 = pneg %p73
        %p213 = scmp.lt.s32.totalorder %s22, 0
        %s214 = scalar_select %p213, %s22, 0
        %s215 = scalar_lea.vmem %s2, %s214
        %p216 = pneg %p102
        %p217 = pneg %p99
        %p218 = pneg %p130
        %p219 = pneg %p127
        %s220 = smul.u32 32, %s21
        %p221 = scmp.lt.s32.totalorder %s220, 255
        %s222 = scalar_select %p221, %s220, 255
        %p223 = scmp.lt.s32.totalorder %s22, 0
        %s224 = scalar_select %p223, %s22, 0
        %s225 = sadd.s32 %s224, %s222
        %s226 = smul.addr %s225, 4
        %s227 = scalar_lea.vmem %s3, %s226
        %s228 = smul.u32 32, %s21
        %p229 = scmp.lt.s32.totalorder %s22, 0
        %s230 = scalar_select %p229, %s22, 0
        %s231 = smul.addr %s230, 4
        %s232 = scalar_lea.vmem %s1, %s231
        %p233 = scmp.lt.s32.totalorder %s22, 0
        %s234 = scalar_select %p233, %s22, 0
        %s235 = scalar_lea.vmem %s2, %s234
        %s236 = smul.u32 32, %s21
        %p237 = scmp.lt.s32.totalorder %s236, 255
        %s238 = scalar_select %p237, %s236, 255
        %p239 = scmp.lt.s32.totalorder %s22, 0
        %s240 = scalar_select %p239, %s22, 0
        %s241 = sadd.s32 %s240, %s238
        %s242 = smul.addr %s241, 4
        %s243 = scalar_lea.vmem %s3, %s242
        %s244 = smul.u32 32, %s21
        %v246 = vld [vmem:[%s195] sm:$0xff]
        %v247 = vld [vmem:[%s195 + $0x8] sm:$0xff]
        %v248 = vld [vmem:[%s195 + $0x10] sm:$0xff]
        %v249 = vld [vmem:[%s195 + $0x18] sm:$0xff]
        %v250 = vld [vmem:[%s195 + $0x20] sm:$0xff]
        %v251 = vld [vmem:[%s195 + $0x28] sm:$0xff]
        %v252 = vld [vmem:[%s195 + $0x30] sm:$0xff]
        %v253 = vld [vmem:[%s195 + $0x38] sm:$0xff]
        %v254 = vld [vmem:[%s195 + $0x40] sm:$0xff]
        %v255 = vld [vmem:[%s195 + $0x48] sm:$0xff]
        %v256 = vld [vmem:[%s195 + $0x50] sm:$0xff]
        %v257 = vld [vmem:[%s195 + $0x58] sm:$0xff]
        %v258 = vld [vmem:[%s195 + $0x60] sm:$0xff]
        %v259 = vld [vmem:[%s195 + $0x68] sm:$0xff]
        %v260 = vld [vmem:[%s195 + $0x70] sm:$0xff]
        %v261 = vld [vmem:[%s195 + $0x78] sm:$0xff]
        %v262 = vld [vmem:[%s195 + $0x80] sm:$0xff]
        %v263 = vld [vmem:[%s195 + $0x88] sm:$0xff]
        %v264 = vld [vmem:[%s195 + $0x90] sm:$0xff]
        %v265 = vld [vmem:[%s195 + $0x98] sm:$0xff]
        %v266 = vld [vmem:[%s195 + $0xa0] sm:$0xff]
        %v267 = vld [vmem:[%s195 + $0xa8] sm:$0xff]
        %v268 = vld [vmem:[%s195 + $0xb0] sm:$0xff]
        %v269 = vld [vmem:[%s195 + $0xb8] sm:$0xff]
        %v270 = vld [vmem:[%s195 + $0xc0] sm:$0xff]
        %v271 = vld [vmem:[%s195 + $0xc8] sm:$0xff]
        %v272 = vld [vmem:[%s195 + $0xd0] sm:$0xff]
        %v273 = vld [vmem:[%s195 + $0xd8] sm:$0xff]
        %v274 = vld [vmem:[%s195 + $0xe0] sm:$0xff]
        %v275 = vld [vmem:[%s195 + $0xe8] sm:$0xff]
        %v276 = vld [vmem:[%s195 + $0xf0] sm:$0xff]
        %v277 = vld [vmem:[%s195 + $0xf8] sm:$0xff]
        %v278 = vld [vmem:[%s232] sm:$0xf]
        %v279 = vld [vmem:[%s232 + $0x4] sm:$0xf]
        %v280 = vld [vmem:[%s232 + $0x8] sm:$0xf]
        %v281 = vld [vmem:[%s232 + $0xc] sm:$0xf]
        %v282 = vld [vmem:[%s232 + $0x10] sm:$0xf]
        %v283 = vld [vmem:[%s232 + $0x14] sm:$0xf]
        %v284 = vld [vmem:[%s232 + $0x18] sm:$0xf]
        %v285 = vld [vmem:[%s232 + $0x1c] sm:$0xf]
        %v286 = vld [vmem:[%s232 + $0x20] sm:$0xf]
        %v287 = vld [vmem:[%s232 + $0x24] sm:$0xf]
        %v288 = vld [vmem:[%s232 + $0x28] sm:$0xf]
        %v289 = vld [vmem:[%s232 + $0x2c] sm:$0xf]
        %v290 = vld [vmem:[%s232 + $0x30] sm:$0xf]
        %v291 = vld [vmem:[%s232 + $0x34] sm:$0xf]
        %v292 = vld [vmem:[%s232 + $0x38] sm:$0xf]
        %v293 = vld [vmem:[%s232 + $0x3c] sm:$0xf]
        %v294 = vld [vmem:[%s232 + $0x40] sm:$0xf]
        %v295 = vld [vmem:[%s232 + $0x44] sm:$0xf]
        %v296 = vld [vmem:[%s232 + $0x48] sm:$0xf]
        %v297 = vld [vmem:[%s232 + $0x4c] sm:$0xf]
        %v298 = vld [vmem:[%s232 + $0x50] sm:$0xf]
        %v299 = vld [vmem:[%s232 + $0x54] sm:$0xf]
        %v300 = vld [vmem:[%s232 + $0x58] sm:$0xf]
        %v301 = vld [vmem:[%s232 + $0x5c] sm:$0xf]
        %v302 = vld [vmem:[%s232 + $0x60] sm:$0xf]
        %v303 = vld [vmem:[%s232 + $0x64] sm:$0xf]
        %v304 = vld [vmem:[%s232 + $0x68] sm:$0xf]
        %v305 = vld [vmem:[%s232 + $0x6c] sm:$0xf]
        %v306 = vld [vmem:[%s232 + $0x70] sm:$0xf]
        %v307 = vld [vmem:[%s232 + $0x74] sm:$0xf]
        %v308 = vld [vmem:[%s232 + $0x78] sm:$0xf]
        %v309 = vld [vmem:[%s232 + $0x7c] sm:$0xf]
        %v310 = vld [vmem:[%s235] sm:$0x1]
        %v312 = vlaneseq
        %v313 = vshrl.u32 %v312, 7
        %v314 = vsub.s32 0, %v313
        %v315 = vrot.slane %v310, %v314
        %v349 = vunpack.c.l.b16 %v246
        %v350 = vunpack.c.h.b16 %v246
        %v351 = vunpack.c.l.b16 %v247
        %v352 = vunpack.c.h.b16 %v247
        %v353 = vunpack.c.l.b16 %v248
        %v354 = vunpack.c.h.b16 %v248
        %v355 = vunpack.c.l.b16 %v249
        %v356 = vunpack.c.h.b16 %v249
        %v357 = vunpack.c.l.b16 %v250
        %v358 = vunpack.c.h.b16 %v250
        %v359 = vunpack.c.l.b16 %v251
        %v360 = vunpack.c.h.b16 %v251
        %v361 = vunpack.c.l.b16 %v252
        %v362 = vunpack.c.h.b16 %v252
        %v363 = vunpack.c.l.b16 %v253
        %v364 = vunpack.c.h.b16 %v253
        %v365 = vunpack.c.l.b16 %v254
        %v366 = vunpack.c.h.b16 %v254
        %v367 = vunpack.c.l.b16 %v255
        %v368 = vunpack.c.h.b16 %v255
        %v369 = vunpack.c.l.b16 %v256
        %v370 = vunpack.c.h.b16 %v256
        %v371 = vunpack.c.l.b16 %v257
        %v372 = vunpack.c.h.b16 %v257
        %v373 = vunpack.c.l.b16 %v258
        %v374 = vunpack.c.h.b16 %v258
        %v375 = vunpack.c.l.b16 %v259
        %v376 = vunpack.c.h.b16 %v259
        %v377 = vunpack.c.l.b16 %v260
        %v378 = vunpack.c.h.b16 %v260
        %v379 = vunpack.c.l.b16 %v261
        %v380 = vunpack.c.h.b16 %v261
        %v381 = vunpack.c.l.b16 %v262
        %v382 = vunpack.c.h.b16 %v262
        %v383 = vunpack.c.l.b16 %v263
        %v384 = vunpack.c.h.b16 %v263
        %v385 = vunpack.c.l.b16 %v264
        %v386 = vunpack.c.h.b16 %v264
        %v387 = vunpack.c.l.b16 %v265
        %v388 = vunpack.c.h.b16 %v265
        %v389 = vunpack.c.l.b16 %v266
        %v390 = vunpack.c.h.b16 %v266
        %v391 = vunpack.c.l.b16 %v267
        %v392 = vunpack.c.h.b16 %v267
        %v393 = vunpack.c.l.b16 %v268
        %v394 = vunpack.c.h.b16 %v268
        %v395 = vunpack.c.l.b16 %v269
        %v396 = vunpack.c.h.b16 %v269
        %v397 = vunpack.c.l.b16 %v270
        %v398 = vunpack.c.h.b16 %v270
        %v399 = vunpack.c.l.b16 %v271
        %v400 = vunpack.c.h.b16 %v271
        %v401 = vunpack.c.l.b16 %v272
        %v402 = vunpack.c.h.b16 %v272
        %v403 = vunpack.c.l.b16 %v273
        %v404 = vunpack.c.h.b16 %v273
        %v405 = vunpack.c.l.b16 %v274
        %v406 = vunpack.c.h.b16 %v274
        %v407 = vunpack.c.l.b16 %v275
        %v408 = vunpack.c.h.b16 %v275
        %v409 = vunpack.c.l.b16 %v276
        %v410 = vunpack.c.h.b16 %v276
        %v411 = vunpack.c.l.b16 %v277
        %v412 = vunpack.c.h.b16 %v277
        %v413 = vpack.c.b16 %v351, %v349
        %v414 = vpack.c.b16 %v352, %v350
        %v415 = vpack.c.b16 %v355, %v353
        %v416 = vpack.c.b16 %v356, %v354
        %v417 = vpack.c.b16 %v359, %v357
        %v418 = vpack.c.b16 %v360, %v358
        %v419 = vpack.c.b16 %v363, %v361
        %v420 = vpack.c.b16 %v364, %v362
        %v421 = vpack.c.b16 %v367, %v365
        %v422 = vpack.c.b16 %v368, %v366
        %v423 = vpack.c.b16 %v371, %v369
        %v424 = vpack.c.b16 %v372, %v370
        %v425 = vpack.c.b16 %v375, %v373
        %v426 = vpack.c.b16 %v376, %v374
        %v427 = vpack.c.b16 %v379, %v377
        %v428 = vpack.c.b16 %v380, %v378
        %v429 = vpack.c.b16 %v383, %v381
        %v430 = vpack.c.b16 %v384, %v382
        %v431 = vpack.c.b16 %v387, %v385
        %v432 = vpack.c.b16 %v388, %v386
        %v433 = vpack.c.b16 %v391, %v389
        %v434 = vpack.c.b16 %v392, %v390
        %v435 = vpack.c.b16 %v395, %v393
        %v436 = vpack.c.b16 %v396, %v394
        %v437 = vpack.c.b16 %v399, %v397
        %v438 = vpack.c.b16 %v400, %v398
        %v439 = vpack.c.b16 %v403, %v401
        %v440 = vpack.c.b16 %v404, %v402
        %v441 = vpack.c.b16 %v407, %v405
        %v442 = vpack.c.b16 %v408, %v406
        %v443 = vpack.c.b16 %v411, %v409
        %v444 = vpack.c.b16 %v412, %v410
        %v509 = vunpack.c.l.b16 %v278
        %v510 = vunpack.c.l.b16 %v279
        %v511 = vunpack.c.l.b16 %v280
        %v512 = vunpack.c.l.b16 %v281
        %v513 = vunpack.c.l.b16 %v282
        %v514 = vunpack.c.l.b16 %v283
        %v515 = vunpack.c.l.b16 %v284
        %v516 = vunpack.c.l.b16 %v285
        %v517 = vunpack.c.l.b16 %v286
        %v518 = vunpack.c.l.b16 %v287
        %v519 = vunpack.c.l.b16 %v288
        %v520 = vunpack.c.l.b16 %v289
        %v521 = vunpack.c.l.b16 %v290
        %v522 = vunpack.c.l.b16 %v291
        %v523 = vunpack.c.l.b16 %v292
        %v524 = vunpack.c.l.b16 %v293
        %v525 = vunpack.c.l.b16 %v294
        %v526 = vunpack.c.l.b16 %v295
        %v527 = vunpack.c.l.b16 %v296
        %v528 = vunpack.c.l.b16 %v297
        %v529 = vunpack.c.l.b16 %v298
        %v530 = vunpack.c.l.b16 %v299
        %v531 = vunpack.c.l.b16 %v300
        %v532 = vunpack.c.l.b16 %v301
        %v533 = vunpack.c.l.b16 %v302
        %v534 = vunpack.c.l.b16 %v303
        %v535 = vunpack.c.l.b16 %v304
        %v536 = vunpack.c.l.b16 %v305
        %v537 = vunpack.c.l.b16 %v306
        %v538 = vunpack.c.l.b16 %v307
        %v539 = vunpack.c.l.b16 %v308
        %v540 = vunpack.c.l.b16 %v309
        %v541 = vpack.c.b16 %v510, %v509
        %v542 = vpack.c.b16 %v512, %v511
        %v543 = vpack.c.b16 %v514, %v513
        %v544 = vpack.c.b16 %v516, %v515
        %v545 = vpack.c.b16 %v518, %v517
        %v546 = vpack.c.b16 %v520, %v519
        %v547 = vpack.c.b16 %v522, %v521
        %v548 = vpack.c.b16 %v524, %v523
        %v549 = vpack.c.b16 %v526, %v525
        %v550 = vpack.c.b16 %v528, %v527
        %v551 = vpack.c.b16 %v530, %v529
        %v552 = vpack.c.b16 %v532, %v531
        %v553 = vpack.c.b16 %v534, %v533
        %v554 = vpack.c.b16 %v536, %v535
        %v555 = vpack.c.b16 %v538, %v537
        %v556 = vpack.c.b16 %v540, %v539
        %573 = vmatprep.subr.bf16.mxu0 0
        %574 = vmatpush1.bf16.msra.mxu0 %v541
        %575 = vmatprep.subr.bf16.mxu0 0
        %576 = vmatpush1.bf16.msra.mxu0 %v542
        %577 = vmatprep.subr.bf16.mxu0 0
        %578 = vmatpush1.bf16.msra.mxu0 %v543
        %579 = vmatprep.subr.bf16.mxu0 0
        %580 = vmatpush1.bf16.msra.mxu0 %v544
        %581 = vmatprep.subr.bf16.mxu0 0
        %582 = vmatpush1.bf16.msra.mxu0 %v545
        %583 = vmatprep.subr.bf16.mxu0 0
        %584 = vmatpush1.bf16.msra.mxu0 %v546
        %585 = vmatprep.subr.bf16.mxu0 0
        %586 = vmatpush1.bf16.msra.mxu0 %v547
        %587 = vmatprep.subr.bf16.mxu0 0
        %588 = vmatpush1.bf16.msra.mxu0 %v548
        %589 = vmatprep.subr.bf16.mxu0 0
        %590 = vmatpush1.bf16.msra.mxu0 %v549
        %591 = vmatprep.subr.bf16.mxu0 0
        %592 = vmatpush1.bf16.msra.mxu0 %v550
        %593 = vmatprep.subr.bf16.mxu0 0
        %594 = vmatpush1.bf16.msra.mxu0 %v551
        %595 = vmatprep.subr.bf16.mxu0 0
        %596 = vmatpush1.bf16.msra.mxu0 %v552
        %597 = vmatprep.subr.bf16.mxu0 0
        %598 = vmatpush1.bf16.msra.mxu0 %v553
        %599 = vmatprep.subr.bf16.mxu0 0
        %600 = vmatpush1.bf16.msra.mxu0 %v554
        %601 = vmatprep.subr.bf16.mxu0 0
        %602 = vmatpush1.bf16.msra.mxu0 %v555
        %603 = vmatprep.subr.bf16.mxu0 0
        %604 = vmatpush1.bf16.msra.mxu0 %v556
        %605 = vmatprep.mubr.bf16.mxu0 %v414
        %606 = vmatmul.mubr.bf16.gmra.mrb[0].mxu0 %v413
        %v607 = vpop.f32.mrb[0].mxu0
        %v608 = vadd.f32 %v315, %v607
        %v609 = vpop.f32.mrb[0].mxu0
        %v610 = vpop.f32.mrb[0].mxu0
        %v611 = vadd.f32 %v315, %v610
        %v612 = vpop.f32.mrb[0].mxu0
        %613 = vmatprep.mubr.bf16.mxu0 %v416
        %614 = vmatmul.mubr.bf16.gmra.mrb[0].mxu0 %v415
        %v615 = vpop.f32.mrb[0].mxu0
        %v616 = vadd.f32 %v315, %v615
        %v617 = vpop.f32.mrb[0].mxu0
        %v618 = vpop.f32.mrb[0].mxu0
        %v619 = vadd.f32 %v315, %v618
        %v620 = vpop.f32.mrb[0].mxu0
        %621 = vmatprep.mubr.bf16.mxu0 %v418
        %622 = vmatmul.mubr.bf16.gmra.mrb[0].mxu0 %v417
        %v623 = vpop.f32.mrb[0].mxu0
        %v624 = vadd.f32 %v315, %v623
        %v625 = vpop.f32.mrb[0].mxu0
        %v626 = vpop.f32.mrb[0].mxu0
        %v627 = vadd.f32 %v315, %v626
        %v628 = vpop.f32.mrb[0].mxu0
        %629 = vmatprep.mubr.bf16.mxu0 %v420
        %630 = vmatmul.mubr.bf16.gmra.mrb[0].mxu0 %v419
        %v631 = vpop.f32.mrb[0].mxu0
        %v632 = vadd.f32 %v315, %v631
        %v633 = vpop.f32.mrb[0].mxu0
        %v634 = vpop.f32.mrb[0].mxu0
        %v635 = vadd.f32 %v315, %v634
        %v636 = vpop.f32.mrb[0].mxu0
        %637 = vmatprep.mubr.bf16.mxu0 %v422
        %638 = vmatmul.mubr.bf16.gmra.mrb[0].mxu0 %v421
        %v639 = vpop.f32.mrb[0].mxu0
        %v640 = vadd.f32 %v315, %v639
        %v641 = vpop.f32.mrb[0].mxu0
        %v642 = vpop.f32.mrb[0].mxu0
        %v643 = vadd.f32 %v315, %v642
        %v644 = vpop.f32.mrb[0].mxu0
        %645 = vmatprep.mubr.bf16.mxu0 %v424
        %646 = vmatmul.mubr.bf16.gmra.mrb[0].mxu0 %v423
        %v647 = vpop.f32.mrb[0].mxu0
        %v648 = vadd.f32 %v315, %v647
        %v649 = vpop.f32.mrb[0].mxu0
        %v650 = vpop.f32.mrb[0].mxu0
        %v651 = vadd.f32 %v315, %v650
        %v652 = vpop.f32.mrb[0].mxu0
        %653 = vmatprep.mubr.bf16.mxu0 %v426
        %654 = vmatmul.mubr.bf16.gmra.mrb[0].mxu0 %v425
        %v655 = vpop.f32.mrb[0].mxu0
        %v656 = vadd.f32 %v315, %v655
        %v657 = vpop.f32.mrb[0].mxu0
        %v658 = vpop.f32.mrb[0].mxu0
        %v659 = vadd.f32 %v315, %v658
        %v660 = vpop.f32.mrb[0].mxu0
        %661 = vmatprep.mubr.bf16.mxu0 %v428
        %662 = vmatmul.mubr.bf16.gmra.mrb[0].mxu0 %v427
        %v663 = vpop.f32.mrb[0].mxu0
        %v664 = vadd.f32 %v315, %v663
        %v665 = vpop.f32.mrb[0].mxu0
        %v666 = vpop.f32.mrb[0].mxu0
        %v667 = vadd.f32 %v315, %v666
        %v668 = vpop.f32.mrb[0].mxu0
        %669 = vmatprep.mubr.bf16.mxu0 %v430
        %670 = vmatmul.mubr.bf16.gmra.mrb[0].mxu0 %v429
        %v671 = vpop.f32.mrb[0].mxu0
        %v672 = vadd.f32 %v315, %v671
        %v673 = vpop.f32.mrb[0].mxu0
        %v674 = vpop.f32.mrb[0].mxu0
        %v675 = vadd.f32 %v315, %v674
        %v676 = vpop.f32.mrb[0].mxu0
        %677 = vmatprep.mubr.bf16.mxu0 %v432
        %678 = vmatmul.mubr.bf16.gmra.mrb[0].mxu0 %v431
        %v679 = vpop.f32.mrb[0].mxu0
        %v680 = vadd.f32 %v315, %v679
        %v681 = vpop.f32.mrb[0].mxu0
        %v682 = vpop.f32.mrb[0].mxu0
        %v683 = vadd.f32 %v315, %v682
        %v684 = vpop.f32.mrb[0].mxu0
        %685 = vmatprep.mubr.bf16.mxu0 %v434
        %686 = vmatmul.mubr.bf16.gmra.mrb[0].mxu0 %v433
        %v687 = vpop.f32.mrb[0].mxu0
        %v688 = vadd.f32 %v315, %v687
        %v689 = vpop.f32.mrb[0].mxu0
        %v690 = vpop.f32.mrb[0].mxu0
        %v691 = vadd.f32 %v315, %v690
        %v692 = vpop.f32.mrb[0].mxu0
        %693 = vmatprep.mubr.bf16.mxu0 %v436
        %694 = vmatmul.mubr.bf16.gmra.mrb[0].mxu0 %v435
        %v695 = vpop.f32.mrb[0].mxu0
        %v696 = vadd.f32 %v315, %v695
        %v697 = vpop.f32.mrb[0].mxu0
        %v698 = vpop.f32.mrb[0].mxu0
        %v699 = vadd.f32 %v315, %v698
        %v700 = vpop.f32.mrb[0].mxu0
        %701 = vmatprep.mubr.bf16.mxu0 %v438
        %702 = vmatmul.mubr.bf16.gmra.mrb[0].mxu0 %v437
        %v703 = vpop.f32.mrb[0].mxu0
        %v704 = vadd.f32 %v315, %v703
        %v705 = vpop.f32.mrb[0].mxu0
        %v706 = vpop.f32.mrb[0].mxu0
        %v707 = vadd.f32 %v315, %v706
        %v708 = vpop.f32.mrb[0].mxu0
        %709 = vmatprep.mubr.bf16.mxu0 %v440
        %710 = vmatmul.mubr.bf16.gmra.mrb[0].mxu0 %v439
        %v711 = vpop.f32.mrb[0].mxu0
        %v712 = vadd.f32 %v315, %v711
        %v713 = vpop.f32.mrb[0].mxu0
        %v714 = vpop.f32.mrb[0].mxu0
        %v715 = vadd.f32 %v315, %v714
        %v716 = vpop.f32.mrb[0].mxu0
        %717 = vmatprep.mubr.bf16.mxu0 %v442
        %718 = vmatmul.mubr.bf16.gmra.mrb[0].mxu0 %v441
        %v719 = vpop.f32.mrb[0].mxu0
        %v720 = vadd.f32 %v315, %v719
        %v721 = vpop.f32.mrb[0].mxu0
        %v722 = vpop.f32.mrb[0].mxu0
        %v723 = vadd.f32 %v315, %v722
        %v724 = vpop.f32.mrb[0].mxu0
        %725 = vmatprep.mubr.bf16.mxu0 %v444
        %726 = vmatmul.mubr.bf16.gmra.mrb[0].mxu0 %v443
        %v727 = vpop.f32.mrb[0].mxu0
        %v728 = vadd.f32 %v315, %v727
        %v729 = vpop.f32.mrb[0].mxu0
        %v730 = vpop.f32.mrb[0].mxu0
        %v731 = vadd.f32 %v315, %v730
        %v732 = vpop.f32.mrb[0].mxu0
        %733 = vdwg.mxu0
        %v734 = vmax.f32 %v608, 0.0
        %v735 = vmax.f32 %v611, 0.0
        %v736 = vmax.f32 %v616, 0.0
        %v737 = vmax.f32 %v619, 0.0
        %v738 = vmax.f32 %v624, 0.0
        %v739 = vmax.f32 %v627, 0.0
        %v740 = vmax.f32 %v632, 0.0
        %v741 = vmax.f32 %v635, 0.0
        %v742 = vmax.f32 %v640, 0.0
        %v743 = vmax.f32 %v643, 0.0
        %v744 = vmax.f32 %v648, 0.0
        %v745 = vmax.f32 %v651, 0.0
        %v746 = vmax.f32 %v656, 0.0
        %v747 = vmax.f32 %v659, 0.0
        %v748 = vmax.f32 %v664, 0.0
        %v749 = vmax.f32 %v667, 0.0
        %v750 = vmax.f32 %v672, 0.0
        %v751 = vmax.f32 %v675, 0.0
        %v752 = vmax.f32 %v680, 0.0
        %v753 = vmax.f32 %v683, 0.0
        %v754 = vmax.f32 %v688, 0.0
        %v755 = vmax.f32 %v691, 0.0
        %v756 = vmax.f32 %v696, 0.0
        %v757 = vmax.f32 %v699, 0.0
        %v758 = vmax.f32 %v704, 0.0
        %v759 = vmax.f32 %v707, 0.0
        %v760 = vmax.f32 %v712, 0.0
        %v761 = vmax.f32 %v715, 0.0
        %v762 = vmax.f32 %v720, 0.0
        %v763 = vmax.f32 %v723, 0.0
        %v764 = vmax.f32 %v728, 0.0
        %v765 = vmax.f32 %v731, 0.0
        %v766 = vpack.c.bf16 %v735, %v734
        %v767 = vpack.c.bf16 %v737, %v736
        %v768 = vpack.c.bf16 %v739, %v738
        %v769 = vpack.c.bf16 %v741, %v740
        %v770 = vpack.c.bf16 %v743, %v742
        %v771 = vpack.c.bf16 %v745, %v744
        %v772 = vpack.c.bf16 %v747, %v746
        %v773 = vpack.c.bf16 %v749, %v748
        %v774 = vpack.c.bf16 %v751, %v750
        %v775 = vpack.c.bf16 %v753, %v752
        %v776 = vpack.c.bf16 %v755, %v754
        %v777 = vpack.c.bf16 %v757, %v756
        %v778 = vpack.c.bf16 %v759, %v758
        %v779 = vpack.c.bf16 %v761, %v760
        %v780 = vpack.c.bf16 %v763, %v762
        %v781 = vpack.c.bf16 %v765, %v764
        %v798 = vunpack.c.l.b16 %v766
        %v799 = vunpack.c.h.b16 %v766
        %v800 = vunpack.c.l.b16 %v767
        %v801 = vunpack.c.h.b16 %v767
        %v802 = vunpack.c.l.b16 %v768
        %v803 = vunpack.c.h.b16 %v768
        %v804 = vunpack.c.l.b16 %v769
        %v805 = vunpack.c.h.b16 %v769
        %v806 = vunpack.c.l.b16 %v770
        %v807 = vunpack.c.h.b16 %v770
        %v808 = vunpack.c.l.b16 %v771
        %v809 = vunpack.c.h.b16 %v771
        %v810 = vunpack.c.l.b16 %v772
        %v811 = vunpack.c.h.b16 %v772
        %v812 = vunpack.c.l.b16 %v773
        %v813 = vunpack.c.h.b16 %v773
        %v814 = vunpack.c.l.b16 %v774
        %v815 = vunpack.c.h.b16 %v774
        %v816 = vunpack.c.l.b16 %v775
        %v817 = vunpack.c.h.b16 %v775
        %v818 = vunpack.c.l.b16 %v776
        %v819 = vunpack.c.h.b16 %v776
        %v820 = vunpack.c.l.b16 %v777
        %v821 = vunpack.c.h.b16 %v777
        %v822 = vunpack.c.l.b16 %v778
        %v823 = vunpack.c.h.b16 %v778
        %v824 = vunpack.c.l.b16 %v779
        %v825 = vunpack.c.h.b16 %v779
        %v826 = vunpack.c.l.b16 %v780
        %v827 = vunpack.c.h.b16 %v780
        %v828 = vunpack.c.l.b16 %v781
        %v829 = vunpack.c.h.b16 %v781
        %v830 = vpack.c.b16 %v798, %v798
        %v831 = vpack.c.b16 %v799, %v799
        %v832 = vpack.c.b16 %v800, %v800
        %v833 = vpack.c.b16 %v801, %v801
        %v834 = vpack.c.b16 %v802, %v802
        %v835 = vpack.c.b16 %v803, %v803
        %v836 = vpack.c.b16 %v804, %v804
        %v837 = vpack.c.b16 %v805, %v805
        %v838 = vpack.c.b16 %v806, %v806
        %v839 = vpack.c.b16 %v807, %v807
        %v840 = vpack.c.b16 %v808, %v808
        %v841 = vpack.c.b16 %v809, %v809
        %v842 = vpack.c.b16 %v810, %v810
        %v843 = vpack.c.b16 %v811, %v811
        %v844 = vpack.c.b16 %v812, %v812
        %v845 = vpack.c.b16 %v813, %v813
        %v846 = vpack.c.b16 %v814, %v814
        %v847 = vpack.c.b16 %v815, %v815
        %v848 = vpack.c.b16 %v816, %v816
        %v849 = vpack.c.b16 %v817, %v817
        %v850 = vpack.c.b16 %v818, %v818
        %v851 = vpack.c.b16 %v819, %v819
        %v852 = vpack.c.b16 %v820, %v820
        %v853 = vpack.c.b16 %v821, %v821
        %v854 = vpack.c.b16 %v822, %v822
        %v855 = vpack.c.b16 %v823, %v823
        %v856 = vpack.c.b16 %v824, %v824
        %v857 = vpack.c.b16 %v825, %v825
        %v858 = vpack.c.b16 %v826, %v826
        %v859 = vpack.c.b16 %v827, %v827
        %v860 = vpack.c.b16 %v828, %v828
        %v861 = vpack.c.b16 %v829, %v829
        %vm894 = vcmask 519168
        %895 = vst.msk [vmem:[%s243] sm:$0xf] %vm894, %v830
        %896 = vst.msk [vmem:[%s243 + $0x4] sm:$0xf] %vm894, %v831
        %897 = vst.msk [vmem:[%s243 + $0x8] sm:$0xf] %vm894, %v832
        %898 = vst.msk [vmem:[%s243 + $0xc] sm:$0xf] %vm894, %v833
        %899 = vst.msk [vmem:[%s243 + $0x10] sm:$0xf] %vm894, %v834
        %900 = vst.msk [vmem:[%s243 + $0x14] sm:$0xf] %vm894, %v835
        %901 = vst.msk [vmem:[%s243 + $0x18] sm:$0xf] %vm894, %v836
        %902 = vst.msk [vmem:[%s243 + $0x1c] sm:$0xf] %vm894, %v837
        %903 = vst.msk [vmem:[%s243 + $0x20] sm:$0xf] %vm894, %v838
        %904 = vst.msk [vmem:[%s243 + $0x24] sm:$0xf] %vm894, %v839
        %905 = vst.msk [vmem:[%s243 + $0x28] sm:$0xf] %vm894, %v840
        %906 = vst.msk [vmem:[%s243 + $0x2c] sm:$0xf] %vm894, %v841
        %907 = vst.msk [vmem:[%s243 + $0x30] sm:$0xf] %vm894, %v842
        %908 = vst.msk [vmem:[%s243 + $0x34] sm:$0xf] %vm894, %v843
        %909 = vst.msk [vmem:[%s243 + $0x38] sm:$0xf] %vm894, %v844
        %910 = vst.msk [vmem:[%s243 + $0x3c] sm:$0xf] %vm894, %v845
        %911 = vst.msk [vmem:[%s243 + $0x40] sm:$0xf] %vm894, %v846
        %912 = vst.msk [vmem:[%s243 + $0x44] sm:$0xf] %vm894, %v847
        %913 = vst.msk [vmem:[%s243 + $0x48] sm:$0xf] %vm894, %v848
        %914 = vst.msk [vmem:[%s243 + $0x4c] sm:$0xf] %vm894, %v849
        %915 = vst.msk [vmem:[%s243 + $0x50] sm:$0xf] %vm894, %v850
        %916 = vst.msk [vmem:[%s243 + $0x54] sm:$0xf] %vm894, %v851
        %917 = vst.msk [vmem:[%s243 + $0x58] sm:$0xf] %vm894, %v852
        %918 = vst.msk [vmem:[%s243 + $0x5c] sm:$0xf] %vm894, %v853
        %919 = vst.msk [vmem:[%s243 + $0x60] sm:$0xf] %vm894, %v854
        %920 = vst.msk [vmem:[%s243 + $0x64] sm:$0xf] %vm894, %v855
        %921 = vst.msk [vmem:[%s243 + $0x68] sm:$0xf] %vm894, %v856
        %922 = vst.msk [vmem:[%s243 + $0x6c] sm:$0xf] %vm894, %v857
        %923 = vst.msk [vmem:[%s243 + $0x70] sm:$0xf] %vm894, %v858
        %924 = vst.msk [vmem:[%s243 + $0x74] sm:$0xf] %vm894, %v859
        %925 = vst.msk [vmem:[%s243 + $0x78] sm:$0xf] %vm894, %v860
        %926 = vst.msk [vmem:[%s243 + $0x7c] sm:$0xf] %vm894, %v861
        %s927 = smul.u32 32, %s21
        %p928 = scmp.lt.s32.totalorder %s927, 255
        %s929 = scalar_select %p928, %s927, 255
        %p930 = scmp.lt.s32.totalorder %s22, 0
        %s931 = scalar_select %p930, %s22, 0
        %s932 = sadd.s32 %s931, %s929
        %s933 = smul.addr %s932, 4
        %s934 = scalar_lea.vmem %s3, %s933
        // Predicated region
        $region37: #{tpu_custom_call.1} parent=31 // pred_check
          %p935 = pneg %p127
        $region38: #{tpu_custom_call.1} parent=31 // pred_check_branch
          %937 = sbr.rel (%p935) target = $region40
        $region39: #{tpu_custom_call.1} parent=31 // pred_region
          %s938 = smul.u32 32, %s21
        $region40: #{tpu_custom_call.1} parent=31 // pred_fallthru
          _
      $region32: #{tpu_custom_call.1} parent=5 // pred_fallthru
        _
      %p939 = scmp.le.s32.totalorder 2, %s12
      // Predicated region
      $region41: #{tpu_custom_call.1} parent=5 // pred_check
        %p940 = pneg %p939
      $region42: #{tpu_custom_call.1} parent=5 // pred_check_branch
        %942 = sbr.rel (%p940) target = $region44
      $region43: #{tpu_custom_call.1} parent=5 // pred_region
        %s943 = ssub.s32 %s12, 2
        // Predicated region
        $region45: #{tpu_custom_call.1} parent=43 // pred_check
          %p944 = pneg %p133
        $region46: #{tpu_custom_call.1} parent=43 // pred_check_branch
          %946 = sbr.rel (%p944) target = $region48
        $region47: #{tpu_custom_call.1} parent=43 // pred_region
          %s947 = smul.u32 32, %s23
          %p948 = scmp.lt.s32.totalorder %s947, 255
          %s949 = scalar_select %p948, %s947, 255
          %p950 = scmp.lt.s32.totalorder %s24, 0
          %s951 = scalar_select %p950, %s24, 0
          %s952 = sadd.s32 %s951, %s949
          %s953 = smul.addr %s952, 4
          %s954 = scalar_lea.vmem %s3, %s953
        $region48: #{tpu_custom_call.1} parent=43 // pred_fallthru
          _
      $region44: #{tpu_custom_call.1} parent=5 // pred_fallthru
        _
    $region6: #{tpu_custom_call.1} parent=1 // loop_footer
      %s16 = sadd.s32 1, %s12
    $region7: #{tpu_custom_call.1} parent=1 // loop_footer_branch
      %11 = sbr.rel target = $region3
    $region8: #{tpu_custom_call.1} parent=1 // loop_exit
      _
    %955 = vsyncpa [#allocation3], 1
    %s956 = scalar_lea.sflag [#allocation3], 1
    %957 = vsyncpa %s956, 1

</llo_original>
